<compile_context>
chip_gen: v5e
topology: v5e:2x2
jax: 0.10.0
libtpu: 0.0.40
codegen_flags: <defaults>
</compile_context>

<pallas_src>
import jax
import jax.numpy as jnp
from jax.experimental import pallas as pl
from jax.experimental.pallas import tpu as pltpu

_LANE = 128
_SUBLANE = 8


def _round_up(n, m):
    return ((n + m - 1) // m) * m


# --------------------------------------------------------------------------
# Kernel: one batch tile through encoder -> reparameterization -> decoder.
# --------------------------------------------------------------------------
def vae_forward_kernel(
    x_ref, eps_ref,
    w1e_ref, b1e_ref,
    w2e_ref, b2e_ref,
    w1d_ref, b1d_ref,
    w2d_ref, b2d_ref,
    enc_ref, x_recon_ref,
):
    """All refs are lane-padded. Weights are bf16; activations/biases are f32.

    enc_ref holds [mu || log_std] concatenated along the lane axis
    (columns [0:lat_p) = mu, [lat_p:2*lat_p) = log_std).
    """
    lat_p = eps_ref.shape[-1]

    x = x_ref[...].astype(jnp.bfloat16)                            # (TB, in_p)

    # ---- Encoder: Linear -> ReLU -> fused (mu || log_std) Linear ----
    h_enc = jnp.dot(x, w1e_ref[...], preferred_element_type=jnp.float32)
    h_enc = jnp.maximum(h_enc + b1e_ref[...], 0.0)                 # (TB, hid_p) f32

    enc = jnp.dot(h_enc.astype(jnp.bfloat16), w2e_ref[...],
                  preferred_element_type=jnp.float32)
    enc = enc + b2e_ref[...]                                       # (TB, 2*lat_p) f32
    mu_z = enc[:, :lat_p]
    log_std_z = enc[:, lat_p:]

    # ---- Reparameterization: z = eps * exp(log_std) + mu  (f32 VPU/EUP) ----
    z = eps_ref[...] * jnp.exp(log_std_z) + mu_z                   # (TB, lat_p)

    # ---- Decoder: Linear -> ReLU -> Linear ----
    h_dec = jnp.dot(z.astype(jnp.bfloat16), w1d_ref[...],
                    preferred_element_type=jnp.float32)
    h_dec = jnp.maximum(h_dec + b1d_ref[...], 0.0)                 # (TB, hid_p)

    x_recon = jnp.dot(h_dec.astype(jnp.bfloat16), w2d_ref[...],
                      preferred_element_type=jnp.float32)
    x_recon = x_recon + b2d_ref[...]                               # (TB, in_p)

    enc_ref[...] = enc
    x_recon_ref[...] = x_recon


# --------------------------------------------------------------------------
# Parameter preparation (one-time): pad to 128-lane multiples, cast to bf16.
# --------------------------------------------------------------------------
def prepare_params(params):
    """Pads all dims to lane multiples and casts weights to bf16.

    The fused encoder head keeps columns [0:lat_p) = mu, [lat_p:2*lat_p) = log_std,
    each head independently zero-padded to lat_p so the split stays lane-aligned.
    Padding is zeros, so padded lanes/rows contribute nothing to the math.
    """
    in_dim, hidden_dim = params["w1e"].shape
    latent_dim = params["w1d"].shape[0]
    in_p = _round_up(in_dim, _LANE)
    hid_p = _round_up(hidden_dim, _LANE)
    lat_p = _round_up(latent_dim, _LANE)

    def pad(a, rows, cols):
        return jnp.pad(a, ((0, rows - a.shape[0]), (0, cols - a.shape[1])))

    w2e_mu = pad(params["w2e"][:, :latent_dim], hid_p, lat_p)
    w2e_ls = pad(params["w2e"][:, latent_dim:], hid_p, lat_p)
    b2e_mu = pad(params["b2e"][:, :latent_dim], 1, lat_p)
    b2e_ls = pad(params["b2e"][:, latent_dim:], 1, lat_p)

    return {
        "w1e": pad(params["w1e"], in_p, hid_p).astype(jnp.bfloat16),
        "b1e": pad(params["b1e"], 1, hid_p),
        "w2e": jnp.concatenate([w2e_mu, w2e_ls], axis=1).astype(jnp.bfloat16),
        "b2e": jnp.concatenate([b2e_mu, b2e_ls], axis=1),
        "w1d": pad(params["w1d"], lat_p, hid_p).astype(jnp.bfloat16),
        "b1d": pad(params["b1d"], 1, hid_p),
        "w2d": pad(params["w2d"], hid_p, in_p).astype(jnp.bfloat16),
        "b2d": pad(params["b2d"], 1, in_p),
    }


# --------------------------------------------------------------------------
# Wrapper: batch-tiled pallas_call.
# --------------------------------------------------------------------------
@jax.jit
def vae_forward(x, eps, pparams):
    """VAE.forward: returns (mu_z, log_std_z, x_recon).  `eps` is self.prior(B)."""
    B, in_dim = x.shape
    latent_dim = eps.shape[1]
    in_p, hid_p = pparams["w1e"].shape
    lat_p = pparams["w1d"].shape[0]

    # Batch tiling: grid axis is "parallel" (megacore on v7x) and lets the
    # Pallas runtime double-buffer x/eps/output tiles against compute.
    tb = min(256, _round_up(B, _SUBLANE))
    b_pad = _round_up(B, tb)
    grid = (pl.cdiv(b_pad, tb),)

    x_p = jnp.pad(x.astype(jnp.float32), ((0, b_pad - B), (0, in_p - in_dim)))
    eps_p = jnp.pad(eps.astype(jnp.float32), ((0, b_pad - B), (0, lat_p - latent_dim)))

    batched = lambda shape: pl.BlockSpec(shape, lambda i: (i, 0))
    resident = lambda shape: pl.BlockSpec(shape, lambda i: (0, 0))  # VMEM-resident across grid

    in_specs = [
        batched((tb, in_p)),             # x tile
        batched((tb, lat_p)),            # eps tile
        resident((in_p, hid_p)),         # w1e (bf16)
        resident((1, hid_p)),            # b1e
        resident((hid_p, 2 * lat_p)),    # w2e (bf16, fused mu||log_std head)
        resident((1, 2 * lat_p)),        # b2e
        resident((lat_p, hid_p)),        # w1d (bf16)
        resident((1, hid_p)),            # b1d
        resident((hid_p, in_p)),         # w2d (bf16)
        resident((1, in_p)),             # b2d
    ]
    out_specs = (
        batched((tb, 2 * lat_p)),        # [mu || log_std], lane-dense
        batched((tb, in_p)),             # x_recon, lane-dense
    )
    out_shape = (
        jax.ShapeDtypeStruct((b_pad, 2 * lat_p), jnp.float32),
        jax.ShapeDtypeStruct((b_pad, in_p), jnp.float32),
    )

    # Explicit VMEM budget: resident weights/biases + double-buffered batch tiles,
    # with 2x headroom, clamped to v7x's 64 MiB physical VMEM.
    weight_bytes = 2 * (in_p * hid_p + hid_p * 2 * lat_p + lat_p * hid_p + hid_p * in_p)
    bias_bytes = 4 * (hid_p + 2 * lat_p + hid_p + in_p)
    tile_bytes = 2 * 4 * tb * (in_p + lat_p + 2 * lat_p + in_p)
    vmem_limit = int(min(max(2 * (weight_bytes + bias_bytes + tile_bytes), 4 << 20),
                         64 << 20))

    enc, x_recon = pl.pallas_call(
        vae_forward_kernel,
        grid=grid,
        in_specs=in_specs,
        out_specs=out_specs,
        out_shape=out_shape,
        compiler_params=pltpu.CompilerParams(
            dimension_semantics=("parallel",),
            vmem_limit_bytes=vmem_limit,
        ),
    )(
        x_p, eps_p,
        pparams["w1e"], pparams["b1e"],
        pparams["w2e"], pparams["b2e"],
        pparams["w1d"], pparams["b1d"],
        pparams["w2d"], pparams["b2d"],
    )

    mu_z = enc[:B, :latent_dim]
    log_std_z = enc[:B, lat_p:lat_p + latent_dim]
    return mu_z, log_std_z, x_recon[:B, :in_dim]


# --------------------------------------------------------------------------
# Init + pure-JAX reference (torch.nn.Linear-style init; x @ W + b layout).
# --------------------------------------------------------------------------
def init_vae_params(key, in_dim, latent_dim, hidden_dim=None):
    if hidden_dim is None:
        hidden_dim = in_dim

    def linear(k, fan_in, fan_out):
        kw, kb = jax.random.split(k)
        bound = fan_in ** -0.5
        w = jax.random.uniform(kw, (fan_in, fan_out), jnp.float32, -bound, bound)
        b = jax.random.uniform(kb, (1, fan_out), jnp.float32, -bound, bound)
        return w, b

    k1, k2, k3, k4 = jax.random.split(key, 4)
    w1e, b1e = linear(k1, in_dim, hidden_dim)
    w2e, b2e = linear(k2, hidden_dim, 2 * latent_dim)   # chunk(2, dim=1): [mu | log_std]
    w1d, b1d = linear(k3, latent_dim, hidden_dim)
    w2d, b2d = linear(k4, hidden_dim, in_dim)
    return {"w1e": w1e, "b1e": b1e, "w2e": w2e, "b2e": b2e,
            "w1d": w1d, "b1d": b1d, "w2d": w2d, "b2d": b2d}


def vae_forward_ref(x, eps, params):
    """Pure-JAX reference of VAE.forward using the same bf16-operand / f32-accum
    matmul convention as the kernel, so tolerances stay tight."""
    latent_dim = params["w1d"].shape[0]
    mm = lambda a, w: jnp.dot(a.astype(jnp.bfloat16), w.astype(jnp.bfloat16),
                              preferred_element_type=jnp.float32)
    h = jnp.maximum(mm(x, params["w1e"]) + params["b1e"], 0.0)
    enc = mm(h, params["w2e"]) + params["b2e"]
    mu, log_std = enc[:, :latent_dim], enc[:, latent_dim:]
    z = eps * jnp.exp(log_std) + mu
    hd = jnp.maximum(mm(z, params["w1d"]) + params["b1d"], 0.0)
    x_recon = mm(hd, params["w2d"]) + params["b2d"]
    return mu, log_std, x_recon


if __name__ == "__main__":
    # Non-multiple-of-128 dims to exercise the lane padding path.
    B, IN_DIM, LATENT_DIM, HIDDEN_DIM = 16, 48, 12, 40

    key = jax.random.PRNGKey(0)
    k_params, k_x, k_eps = jax.random.split(key, 3)

    params = init_vae_params(k_params, IN_DIM, LATENT_DIM, HIDDEN_DIM)
    pparams = prepare_params(params)

    x = jax.random.normal(k_x, (B, IN_DIM), jnp.float32)
    # `self.prior(x.shape[0])` = standard normal noise; drawn outside the kernel
    # so the run is deterministic and directly comparable to the reference.
    eps = jax.random.normal(k_eps, (B, LATENT_DIM), jnp.float32)

    mu_z, log_std_z, x_recon = vae_forward(x, eps, pparams)
    jax.block_until_ready((mu_z, log_std_z, x_recon))

    mu_r, ls_r, xr_r = vae_forward_ref(x, eps, params)
    assert mu_z.shape == (B, LATENT_DIM) and log_std_z.shape == (B, LATENT_DIM)
    assert x_recon.shape == (B, IN_DIM)
    assert jnp.allclose(mu_z, mu_r, atol=1e-2, rtol=1e-2)
    assert jnp.allclose(log_std_z, ls_r, atol=1e-2, rtol=1e-2)
    assert jnp.allclose(x_recon, xr_r, atol=2e-2, rtol=2e-2)

    print("KERNEL_OK")
</pallas_src>

<mosaic_0001>
module attributes {stable_mosaic.version = 11 : i64} {
  func.func @vae_forward_kernel(%arg0: i32, %arg1: memref<16x128xf32, #tpu.memory_space<vmem>>, %arg2: memref<16x128xf32, #tpu.memory_space<vmem>>, %arg3: memref<128x128xbf16, #tpu.memory_space<vmem>>, %arg4: memref<1x128xf32, #tpu.memory_space<vmem>>, %arg5: memref<128x256xbf16, #tpu.memory_space<vmem>>, %arg6: memref<1x256xf32, #tpu.memory_space<vmem>>, %arg7: memref<128x128xbf16, #tpu.memory_space<vmem>>, %arg8: memref<1x128xf32, #tpu.memory_space<vmem>>, %arg9: memref<128x128xbf16, #tpu.memory_space<vmem>>, %arg10: memref<1x128xf32, #tpu.memory_space<vmem>>, %arg11: memref<16x256xf32, #tpu.memory_space<vmem>>, %arg12: memref<16x128xf32, #tpu.memory_space<vmem>>) attributes {dimension_semantics = [#tpu.dimension_semantics<parallel>], iteration_bounds = array<i64: 1>, scalar_prefetch = 0 : i64, scratch_operands = 0 : i64, tpu.core_type = #tpu.core_type<tc>, window_params = [{transform_indices = @transform_0, window_bounds = array<i64: 16, 128>}, {transform_indices = @transform_1, window_bounds = array<i64: 16, 128>}, {pipeline_mode = #tpu.pipeline_mode<synchronous>, transform_indices = @transform_2, window_bounds = array<i64: 128, 128>}, {pipeline_mode = #tpu.pipeline_mode<synchronous>, transform_indices = @transform_3, window_bounds = array<i64: 1, 128>}, {pipeline_mode = #tpu.pipeline_mode<synchronous>, transform_indices = @transform_4, window_bounds = array<i64: 128, 256>}, {pipeline_mode = #tpu.pipeline_mode<synchronous>, transform_indices = @transform_5, window_bounds = array<i64: 1, 256>}, {pipeline_mode = #tpu.pipeline_mode<synchronous>, transform_indices = @transform_6, window_bounds = array<i64: 128, 128>}, {pipeline_mode = #tpu.pipeline_mode<synchronous>, transform_indices = @transform_7, window_bounds = array<i64: 1, 128>}, {pipeline_mode = #tpu.pipeline_mode<synchronous>, transform_indices = @transform_8, window_bounds = array<i64: 128, 128>}, {pipeline_mode = #tpu.pipeline_mode<synchronous>, transform_indices = @transform_9, window_bounds = array<i64: 1, 128>}, {transform_indices = @transform_10, window_bounds = array<i64: 16, 256>}, {transform_indices = @transform_11, window_bounds = array<i64: 16, 128>}]} {
    %c0 = arith.constant 0 : index
    %c0_0 = arith.constant 0 : index
    %0 = vector.load %arg1[%c0, %c0_0] : memref<16x128xf32, #tpu.memory_space<vmem>>, vector<16x128xf32>
    %1 = arith.truncf %0 : vector<16x128xf32> to vector<16x128xbf16>
    %c0_1 = arith.constant 0 : index
    %c0_2 = arith.constant 0 : index
    %2 = vector.load %arg3[%c0_1, %c0_2] : memref<128x128xbf16, #tpu.memory_space<vmem>>, vector<128x128xbf16>
    %cst = arith.constant dense<0.000000e+00> : vector<16x128xf32>
    %3 = tpu.matmul %1, %2, %cst {dimension_numbers = #tpu.dot_dimension_numbers<[1], [0], [0], [1], [0, 0, 1, 1], [], []>} : vector<16x128xbf16>, vector<128x128xbf16>, vector<16x128xf32> -> vector<16x128xf32>
    %c0_3 = arith.constant 0 : index
    %c0_4 = arith.constant 0 : index
    %4 = vector.load %arg4[%c0_3, %c0_4] : memref<1x128xf32, #tpu.memory_space<vmem>>, vector<1x128xf32>
    %5 = vector.broadcast %4 : vector<1x128xf32> to vector<16x128xf32>
    %6 = arith.addf %3, %5 : vector<16x128xf32>
    %cst_5 = arith.constant 0.000000e+00 : f32
    %7 = vector.broadcast %cst_5 : f32 to vector<16x128xf32>
    %8 = arith.maximumf %6, %7 : vector<16x128xf32>
    %9 = arith.truncf %8 : vector<16x128xf32> to vector<16x128xbf16>
    %c0_6 = arith.constant 0 : index
    %c0_7 = arith.constant 0 : index
    %10 = vector.load %arg5[%c0_6, %c0_7] : memref<128x256xbf16, #tpu.memory_space<vmem>>, vector<128x256xbf16>
    %cst_8 = arith.constant dense<0.000000e+00> : vector<16x256xf32>
    %11 = tpu.matmul %9, %10, %cst_8 {dimension_numbers = #tpu.dot_dimension_numbers<[1], [0], [0], [1], [0, 0, 1, 1], [], []>} : vector<16x128xbf16>, vector<128x256xbf16>, vector<16x256xf32> -> vector<16x256xf32>
    %c0_9 = arith.constant 0 : index
    %c0_10 = arith.constant 0 : index
    %12 = vector.load %arg6[%c0_9, %c0_10] : memref<1x256xf32, #tpu.memory_space<vmem>>, vector<1x256xf32>
    %13 = vector.broadcast %12 : vector<1x256xf32> to vector<16x256xf32>
    %14 = arith.addf %11, %13 : vector<16x256xf32>
    %15 = vector.extract_strided_slice %14 {offsets = [0, 0], sizes = [16, 128], strides = [1, 1]} : vector<16x256xf32> to vector<16x128xf32>
    %16 = vector.extract_strided_slice %14 {offsets = [0, 128], sizes = [16, 128], strides = [1, 1]} : vector<16x256xf32> to vector<16x128xf32>
    %c0_11 = arith.constant 0 : index
    %c0_12 = arith.constant 0 : index
    %17 = vector.load %arg2[%c0_11, %c0_12] : memref<16x128xf32, #tpu.memory_space<vmem>>, vector<16x128xf32>
    %18 = math.exp %16 : vector<16x128xf32>
    %19 = arith.mulf %17, %18 : vector<16x128xf32>
    %20 = arith.addf %19, %15 : vector<16x128xf32>
    %21 = arith.truncf %20 : vector<16x128xf32> to vector<16x128xbf16>
    %c0_13 = arith.constant 0 : index
    %c0_14 = arith.constant 0 : index
    %22 = vector.load %arg7[%c0_13, %c0_14] : memref<128x128xbf16, #tpu.memory_space<vmem>>, vector<128x128xbf16>
    %cst_15 = arith.constant dense<0.000000e+00> : vector<16x128xf32>
    %23 = tpu.matmul %21, %22, %cst_15 {dimension_numbers = #tpu.dot_dimension_numbers<[1], [0], [0], [1], [0, 0, 1, 1], [], []>} : vector<16x128xbf16>, vector<128x128xbf16>, vector<16x128xf32> -> vector<16x128xf32>
    %c0_16 = arith.constant 0 : index
    %c0_17 = arith.constant 0 : index
    %24 = vector.load %arg8[%c0_16, %c0_17] : memref<1x128xf32, #tpu.memory_space<vmem>>, vector<1x128xf32>
    %25 = vector.broadcast %24 : vector<1x128xf32> to vector<16x128xf32>
    %26 = arith.addf %23, %25 : vector<16x128xf32>
    %cst_18 = arith.constant 0.000000e+00 : f32
    %27 = vector.broadcast %cst_18 : f32 to vector<16x128xf32>
    %28 = arith.maximumf %26, %27 : vector<16x128xf32>
    %29 = arith.truncf %28 : vector<16x128xf32> to vector<16x128xbf16>
    %c0_19 = arith.constant 0 : index
    %c0_20 = arith.constant 0 : index
    %30 = vector.load %arg9[%c0_19, %c0_20] : memref<128x128xbf16, #tpu.memory_space<vmem>>, vector<128x128xbf16>
    %cst_21 = arith.constant dense<0.000000e+00> : vector<16x128xf32>
    %31 = tpu.matmul %29, %30, %cst_21 {dimension_numbers = #tpu.dot_dimension_numbers<[1], [0], [0], [1], [0, 0, 1, 1], [], []>} : vector<16x128xbf16>, vector<128x128xbf16>, vector<16x128xf32> -> vector<16x128xf32>
    %c0_22 = arith.constant 0 : index
    %c0_23 = arith.constant 0 : index
    %32 = vector.load %arg10[%c0_22, %c0_23] : memref<1x128xf32, #tpu.memory_space<vmem>>, vector<1x128xf32>
    %33 = vector.broadcast %32 : vector<1x128xf32> to vector<16x128xf32>
    %34 = arith.addf %31, %33 : vector<16x128xf32>
    %c0_24 = arith.constant 0 : index
    %c0_25 = arith.constant 0 : index
    %35 = vector.load %arg11[%c0_24, %c0_25] : memref<16x256xf32, #tpu.memory_space<vmem>>, vector<16x256xf32>
    tpu.vector_store %arg11[%c0_24, %c0_25], %14 {strides = array<i32>} : memref<16x256xf32, #tpu.memory_space<vmem>>, vector<16x256xf32>,
    %c0_26 = arith.constant 0 : index
    %c0_27 = arith.constant 0 : index
    %36 = vector.load %arg12[%c0_26, %c0_27] : memref<16x128xf32, #tpu.memory_space<vmem>>, vector<16x128xf32>
    tpu.vector_store %arg12[%c0_26, %c0_27], %34 {strides = array<i32>} : memref<16x128xf32, #tpu.memory_space<vmem>>, vector<16x128xf32>,
    return
  }
  func.func @transform_0(%arg0: i32) -> (i32, i32) {
    %c0_i32 = arith.constant 0 : i32
    %c0_i32_0 = arith.constant 0 : i32
    return %arg0, %c0_i32 : i32, i32
  }
  func.func @transform_1(%arg0: i32) -> (i32, i32) {
    %c0_i32 = arith.constant 0 : i32
    %c0_i32_0 = arith.constant 0 : i32
    return %arg0, %c0_i32 : i32, i32
  }
  func.func @transform_2(%arg0: i32) -> (i32, i32) {
    %c0_i32 = arith.constant 0 : i32
    %c0_i32_0 = arith.constant 0 : i32
    %c0_i32_1 = arith.constant 0 : i32
    return %c0_i32, %c0_i32_0 : i32, i32
  }
  func.func @transform_3(%arg0: i32) -> (i32, i32) {
    %c0_i32 = arith.constant 0 : i32
    %c0_i32_0 = arith.constant 0 : i32
    %c0_i32_1 = arith.constant 0 : i32
    return %c0_i32, %c0_i32_0 : i32, i32
  }
  func.func @transform_4(%arg0: i32) -> (i32, i32) {
    %c0_i32 = arith.constant 0 : i32
    %c0_i32_0 = arith.constant 0 : i32
    %c0_i32_1 = arith.constant 0 : i32
    return %c0_i32, %c0_i32_0 : i32, i32
  }
  func.func @transform_5(%arg0: i32) -> (i32, i32) {
    %c0_i32 = arith.constant 0 : i32
    %c0_i32_0 = arith.constant 0 : i32
    %c0_i32_1 = arith.constant 0 : i32
    return %c0_i32, %c0_i32_0 : i32, i32
  }
  func.func @transform_6(%arg0: i32) -> (i32, i32) {
    %c0_i32 = arith.constant 0 : i32
    %c0_i32_0 = arith.constant 0 : i32
    %c0_i32_1 = arith.constant 0 : i32
    return %c0_i32, %c0_i32_0 : i32, i32
  }
  func.func @transform_7(%arg0: i32) -> (i32, i32) {
    %c0_i32 = arith.constant 0 : i32
    %c0_i32_0 = arith.constant 0 : i32
    %c0_i32_1 = arith.constant 0 : i32
    return %c0_i32, %c0_i32_0 : i32, i32
  }
  func.func @transform_8(%arg0: i32) -> (i32, i32) {
    %c0_i32 = arith.constant 0 : i32
    %c0_i32_0 = arith.constant 0 : i32
    %c0_i32_1 = arith.constant 0 : i32
    return %c0_i32, %c0_i32_0 : i32, i32
  }
  func.func @transform_9(%arg0: i32) -> (i32, i32) {
    %c0_i32 = arith.constant 0 : i32
    %c0_i32_0 = arith.constant 0 : i32
    %c0_i32_1 = arith.constant 0 : i32
    return %c0_i32, %c0_i32_0 : i32, i32
  }
  func.func @transform_10(%arg0: i32) -> (i32, i32) {
    %c0_i32 = arith.constant 0 : i32
    %c0_i32_0 = arith.constant 0 : i32
    return %arg0, %c0_i32 : i32, i32
  }
  func.func @transform_11(%arg0: i32) -> (i32, i32) {
    %c0_i32 = arith.constant 0 : i32
    %c0_i32_0 = arith.constant 0 : i32
    return %arg0, %c0_i32 : i32, i32
  }
}

</mosaic_0001>

<llo_original>
// kernel: vae_forward.1
$region0: #{vae_forward.1}
  #allocation0 [shape = 'u32[]', space=smem, size = 0x4, offset = 0x4, fixed_abs, tag = 'smem constant byte address 0x4 - core index']
  #allocation1 [shape = 'u32[72,128]{1,0:T(1,128)}', space=vmem, size = 0x9000, scoped, tag = 'internal scratch']
  %s0 = inlined_call_operand.vmem [shape: f32[16,128], index: 0, kind: input, shape index: {}]
  %s1 = inlined_call_operand.vmem [shape: f32[16,128], index: 1, kind: input, shape index: {}]
  %s2 = inlined_call_operand.hbm [shape: bf16[128,128], index: 2, kind: input, shape index: {}]
  %s3 = inlined_call_operand.vmem [shape: f32[1,128], index: 3, kind: input, shape index: {}]
  %s4 = inlined_call_operand.hbm [shape: bf16[128,256], index: 4, kind: input, shape index: {}]
  %s5 = inlined_call_operand.vmem [shape: f32[1,256], index: 5, kind: input, shape index: {}]
  %s6 = inlined_call_operand.hbm [shape: bf16[128,128], index: 6, kind: input, shape index: {}]
  %s7 = inlined_call_operand.vmem [shape: f32[1,128], index: 7, kind: input, shape index: {}]
  %s8 = inlined_call_operand.hbm [shape: bf16[128,128], index: 8, kind: input, shape index: {}]
  %s9 = inlined_call_operand.vmem [shape: f32[1,128], index: 9, kind: input, shape index: {}]
  %s10 = inlined_call_operand.vmem [shape: f32[16,256], index: 10, kind: output, shape index: {0}]
  %s11 = inlined_call_operand.hbm [shape: f32[16,128], index: 11, kind: output, shape index: {1}]
  %12 = xla_tuple %s10, %s11
  %s13 = sld [smem:[#allocation0]]
  $region74: #{vae_forward.1} parent=0
    _
  %s15 = ssub.s32 1, %s13
  %s16 = scalar_select 0, %s15, %s13
  $region1: #{vae_forward.1} parent=0
    #allocation2 [shape = 'u8[32768]{0}', space=vmem, size = 0x8000, scoped, tag = 'input window, operand 2, single buffered']
    #allocation3 [shape = 's32[1]{0}', space=sflag, size = 0x4, scoped, tag = 'scoped memory for vae_forward.1']
    #allocation4 [shape = 's32[1]{0}', space=sflag, size = 0x4, scoped, tag = 'scoped memory for vae_forward.1']
    #allocation5 [shape = 'u8[65536]{0}', space=vmem, size = 0x10000, scoped, tag = 'input window, operand 4, single buffered']
    #allocation6 [shape = 's32[1]{0}', space=sflag, size = 0x4, scoped, tag = 'scoped memory for vae_forward.1']
    #allocation7 [shape = 'u8[32768]{0}', space=vmem, size = 0x8000, scoped, tag = 'input window, operand 6, single buffered']
    #allocation8 [shape = 'u8[32768]{0}', space=vmem, size = 0x8000, scoped, tag = 'input window, operand 8, single buffered']
    #allocation9 [shape = 's32[1]{0}', space=sflag, size = 0x4, scoped, tag = 'scoped memory for vae_forward.1']
    #allocation10 [shape = 'u8[8192]{0}', space=vmem, size = 0x2000, scoped, tag = 'output window, operand 1, single buffered']
    %17 = vsyncpa [#allocation3], 0
    %18 = vsyncpa [#allocation6], 0
    %19 = vsyncpa [#allocation9], 0
    %20 = vsyncpa [#allocation4], 0
    // Predicated region
    $region2: #{vae_forward.1} parent=1 // pred_check
      _
    $region3: #{vae_forward.1} parent=1 // pred_check_branch
      %22 = sbr.rel (0) target = $region5
    $region4: #{vae_forward.1} parent=1 // pred_region
      _
    $region5: #{vae_forward.1} parent=1 // pred_fallthru
      _
    // Predicated region
    $region6: #{vae_forward.1} parent=1 // pred_check
      _
    $region7: #{vae_forward.1} parent=1 // pred_check_branch
      %24 = sbr.rel (0) target = $region9
    $region8: #{vae_forward.1} parent=1 // pred_region
      _
    $region9: #{vae_forward.1} parent=1 // pred_fallthru
      _
    // Predicated region
    $region10: #{vae_forward.1} parent=1 // pred_check
      _
    $region11: #{vae_forward.1} parent=1 // pred_check_branch
      %26 = sbr.rel (0) target = $region13
    $region12: #{vae_forward.1} parent=1 // pred_region
      %28 = vsyncadd [#allocation3], 0
      %s29 = sshll.u32 %s2, 4
      %s30 = int_to_ptr.hbm [resolvable:$true] %s29
      %s31 = sshll.u32 [#allocation2], 4
      %s32 = int_to_ptr.vmem [resolvable:$true] %s31
      %37 = dma.hbm_to_vmem [thread:$0]  %s30, 1024, %s32, [#allocation3], 64, 64, 4
    $region13: #{vae_forward.1} parent=1 // pred_fallthru
      _
    // Predicated region
    $region14: #{vae_forward.1} parent=1 // pred_check
      _
    $region15: #{vae_forward.1} parent=1 // pred_check_branch
      %39 = sbr.rel (0) target = $region17
    $region16: #{vae_forward.1} parent=1 // pred_region
      _
    $region17: #{vae_forward.1} parent=1 // pred_fallthru
      _
    // Predicated region
    $region18: #{vae_forward.1} parent=1 // pred_check
      _
    $region19: #{vae_forward.1} parent=1 // pred_check_branch
      %41 = sbr.rel (0) target = $region21
    $region20: #{vae_forward.1} parent=1 // pred_region
      %43 = vsyncadd [#allocation6], 0
      %s44 = sshll.u32 %s4, 4
      %s45 = int_to_ptr.hbm [resolvable:$true] %s44
      %s46 = sshll.u32 [#allocation5], 4
      %s47 = int_to_ptr.vmem [resolvable:$true] %s46
      %52 = dma.hbm_to_vmem [thread:$0]  %s45, 2048, %s47, [#allocation6], 128, 128, 8
    $region21: #{vae_forward.1} parent=1 // pred_fallthru
      _
    // Predicated region
    $region22: #{vae_forward.1} parent=1 // pred_check
      _
    $region23: #{vae_forward.1} parent=1 // pred_check_branch
      %54 = sbr.rel (0) target = $region25
    $region24: #{vae_forward.1} parent=1 // pred_region
      _
    $region25: #{vae_forward.1} parent=1 // pred_fallthru
      _
    // Predicated region
    $region26: #{vae_forward.1} parent=1 // pred_check
      _
    $region27: #{vae_forward.1} parent=1 // pred_check_branch
      %56 = sbr.rel (0) target = $region29
    $region28: #{vae_forward.1} parent=1 // pred_region
      %58 = vsyncadd [#allocation6], 0
      %s59 = sshll.u32 %s6, 4
      %s60 = int_to_ptr.hbm [resolvable:$true] %s59
      %s61 = sshll.u32 [#allocation7], 4
      %s62 = int_to_ptr.vmem [resolvable:$true] %s61
      %67 = dma.hbm_to_vmem [thread:$0]  %s60, 1024, %s62, [#allocation6], 64, 64, 4
    $region29: #{vae_forward.1} parent=1 // pred_fallthru
      _
    // Predicated region
    $region30: #{vae_forward.1} parent=1 // pred_check
      _
    $region31: #{vae_forward.1} parent=1 // pred_check_branch
      %69 = sbr.rel (0) target = $region33
    $region32: #{vae_forward.1} parent=1 // pred_region
      _
    $region33: #{vae_forward.1} parent=1 // pred_fallthru
      _
    // Predicated region
    $region34: #{vae_forward.1} parent=1 // pred_check
      _
    $region35: #{vae_forward.1} parent=1 // pred_check_branch
      %71 = sbr.rel (0) target = $region37
    $region36: #{vae_forward.1} parent=1 // pred_region
      %73 = vsyncadd [#allocation9], 0
      %s74 = sshll.u32 %s8, 4
      %s75 = int_to_ptr.hbm [resolvable:$true] %s74
      %s76 = sshll.u32 [#allocation8], 4
      %s77 = int_to_ptr.vmem [resolvable:$true] %s76
      %82 = dma.hbm_to_vmem [thread:$0]  %s75, 1024, %s77, [#allocation9], 64, 64, 4
    $region37: #{vae_forward.1} parent=1 // pred_fallthru
      _
    // Predicated region
    $region38: #{vae_forward.1} parent=1 // pred_check
      _
    $region39: #{vae_forward.1} parent=1 // pred_check_branch
      %84 = sbr.rel (0) target = $region41
    $region40: #{vae_forward.1} parent=1 // pred_region
      _
    $region41: #{vae_forward.1} parent=1 // pred_fallthru
      _
    // Predicated region
    $region42: #{vae_forward.1} parent=1 // pred_check
      _
    $region43: #{vae_forward.1} parent=1 // pred_check_branch
      %86 = sbr.rel (0) target = $region45
    $region44: #{vae_forward.1} parent=1 // pred_region
      %88 = dma.done [#allocation3], 1024
    $region45: #{vae_forward.1} parent=1 // pred_fallthru
      _
    // Predicated region
    $region46: #{vae_forward.1} parent=1 // pred_check
      _
    $region47: #{vae_forward.1} parent=1 // pred_check_branch
      %90 = sbr.rel (0) target = $region49
    $region48: #{vae_forward.1} parent=1 // pred_region
      %92 = dma.done [#allocation6], 2048
    $region49: #{vae_forward.1} parent=1 // pred_fallthru
      _
    // Predicated region
    $region50: #{vae_forward.1} parent=1 // pred_check
      _
    $region51: #{vae_forward.1} parent=1 // pred_check_branch
      %94 = sbr.rel (0) target = $region53
    $region52: #{vae_forward.1} parent=1 // pred_region
      %96 = dma.done [#allocation6], 1024
    $region53: #{vae_forward.1} parent=1 // pred_fallthru
      _
    // Predicated region
    $region54: #{vae_forward.1} parent=1 // pred_check
      _
    $region55: #{vae_forward.1} parent=1 // pred_check_branch
      %98 = sbr.rel (0) target = $region57
    $region56: #{vae_forward.1} parent=1 // pred_region
      %100 = dma.done [#allocation9], 1024
    $region57: #{vae_forward.1} parent=1 // pred_fallthru
      _
    %v101 = vld [vmem:[%s0] sm:$0xff]
    %v102 = vld [vmem:[%s0 + $0x8] sm:$0xff]
    %v103 = vpack.c.bf16 %v102, %v101
    %v104 = vld [vmem:[#allocation2] sm:$0xf]
    %v105 = vld [vmem:[#allocation2 + $0x4] sm:$0xf]
    %v106 = vld [vmem:[#allocation2 + $0x8] sm:$0xf]
    %v107 = vld [vmem:[#allocation2 + $0xc] sm:$0xf]
    %v108 = vld [vmem:[#allocation2 + $0x10] sm:$0xf]
    %v109 = vld [vmem:[#allocation2 + $0x14] sm:$0xf]
    %v110 = vld [vmem:[#allocation2 + $0x18] sm:$0xf]
    %v111 = vld [vmem:[#allocation2 + $0x1c] sm:$0xf]
    %v112 = vld [vmem:[#allocation2 + $0x20] sm:$0xf]
    %v113 = vld [vmem:[#allocation2 + $0x24] sm:$0xf]
    %v114 = vld [vmem:[#allocation2 + $0x28] sm:$0xf]
    %v115 = vld [vmem:[#allocation2 + $0x2c] sm:$0xf]
    %v116 = vld [vmem:[#allocation2 + $0x30] sm:$0xf]
    %v117 = vld [vmem:[#allocation2 + $0x34] sm:$0xf]
    %v118 = vld [vmem:[#allocation2 + $0x38] sm:$0xf]
    %v119 = vld [vmem:[#allocation2 + $0x3c] sm:$0xf]
    %v120 = vld [vmem:[%s3] sm:$0x1]
    %v122 = vperm.slane %v120, 0
    %v140 = vunpack.c.l.b16 %v104
    %v141 = vunpack.c.l.b16 %v105
    %v142 = vunpack.c.l.b16 %v106
    %v143 = vunpack.c.l.b16 %v107
    %v144 = vunpack.c.l.b16 %v108
    %v145 = vunpack.c.l.b16 %v109
    %v146 = vunpack.c.l.b16 %v110
    %v147 = vunpack.c.l.b16 %v111
    %v148 = vunpack.c.l.b16 %v112
    %v149 = vunpack.c.l.b16 %v113
    %v150 = vunpack.c.l.b16 %v114
    %v151 = vunpack.c.l.b16 %v115
    %v152 = vunpack.c.l.b16 %v116
    %v153 = vunpack.c.l.b16 %v117
    %v154 = vunpack.c.l.b16 %v118
    %v155 = vunpack.c.l.b16 %v119
    %v156 = vpack.c.b16 %v141, %v140
    %v157 = vpack.c.b16 %v143, %v142
    %v158 = vpack.c.b16 %v145, %v144
    %v159 = vpack.c.b16 %v147, %v146
    %v160 = vpack.c.b16 %v149, %v148
    %v161 = vpack.c.b16 %v151, %v150
    %v162 = vpack.c.b16 %v153, %v152
    %v163 = vpack.c.b16 %v155, %v154
    %172 = vmatpush.bf16.msra.mxu0 %v163
    %173 = vmatpush.bf16.msra.mxu0 %v162
    %174 = vmatpush.bf16.msra.mxu0 %v161
    %175 = vmatpush.bf16.msra.mxu0 %v160
    %176 = vmatpush.bf16.msra.mxu0 %v159
    %177 = vmatpush.bf16.msra.mxu0 %v158
    %178 = vmatpush.bf16.msra.mxu0 %v157
    %179 = vmatpush.bf16.msra.mxu0 %v156
    %180 = vmatmul.bf16.gmra.mxu0 %v103
    %v181 = vpop.f32.mrf.mxu0
    %v182 = vadd.f32 %v122, %v181
    %v183 = vpop.f32.mrf.mxu0
    %v184 = vadd.f32 %v122, %v183
    %185 = vdwg.mxu0
    %v186 = vmax.f32 %v182, 0.0
    %v187 = vmax.f32 %v184, 0.0
    %v188 = vpack.c.bf16 %v187, %v186
    %v189 = vld [vmem:[#allocation5] sm:$0xff]
    %v190 = vld [vmem:[#allocation5 + $0x8] sm:$0xff]
    %v191 = vld [vmem:[#allocation5 + $0x10] sm:$0xff]
    %v192 = vld [vmem:[#allocation5 + $0x18] sm:$0xff]
    %v193 = vld [vmem:[#allocation5 + $0x20] sm:$0xff]
    %v194 = vld [vmem:[#allocation5 + $0x28] sm:$0xff]
    %v195 = vld [vmem:[#allocation5 + $0x30] sm:$0xff]
    %v196 = vld [vmem:[#allocation5 + $0x38] sm:$0xff]
    %v197 = vld [vmem:[#allocation5 + $0x40] sm:$0xff]
    %v198 = vld [vmem:[#allocation5 + $0x48] sm:$0xff]
    %v199 = vld [vmem:[#allocation5 + $0x50] sm:$0xff]
    %v200 = vld [vmem:[#allocation5 + $0x58] sm:$0xff]
    %v201 = vld [vmem:[#allocation5 + $0x60] sm:$0xff]
    %v202 = vld [vmem:[#allocation5 + $0x68] sm:$0xff]
    %v203 = vld [vmem:[#allocation5 + $0x70] sm:$0xff]
    %v204 = vld [vmem:[#allocation5 + $0x78] sm:$0xff]
    %v205 = vld [vmem:[%s5] sm:$0x3]
    %v207 = vperm.slane %v205, 0
    %v208 = vperm.slane %v205, 1
    %v227 = vunpack.c.l.b16 %v189
    %v228 = vunpack.c.h.b16 %v189
    %v229 = vunpack.c.l.b16 %v190
    %v230 = vunpack.c.h.b16 %v190
    %v231 = vunpack.c.l.b16 %v191
    %v232 = vunpack.c.h.b16 %v191
    %v233 = vunpack.c.l.b16 %v192
    %v234 = vunpack.c.h.b16 %v192
    %v235 = vunpack.c.l.b16 %v193
    %v236 = vunpack.c.h.b16 %v193
    %v237 = vunpack.c.l.b16 %v194
    %v238 = vunpack.c.h.b16 %v194
    %v239 = vunpack.c.l.b16 %v195
    %v240 = vunpack.c.h.b16 %v195
    %v241 = vunpack.c.l.b16 %v196
    %v242 = vunpack.c.h.b16 %v196
    %v243 = vunpack.c.l.b16 %v197
    %v244 = vunpack.c.h.b16 %v197
    %v245 = vunpack.c.l.b16 %v198
    %v246 = vunpack.c.h.b16 %v198
    %v247 = vunpack.c.l.b16 %v199
    %v248 = vunpack.c.h.b16 %v199
    %v249 = vunpack.c.l.b16 %v200
    %v250 = vunpack.c.h.b16 %v200
    %v251 = vunpack.c.l.b16 %v201
    %v252 = vunpack.c.h.b16 %v201
    %v253 = vunpack.c.l.b16 %v202
    %v254 = vunpack.c.h.b16 %v202
    %v255 = vunpack.c.l.b16 %v203
    %v256 = vunpack.c.h.b16 %v203
    %v257 = vunpack.c.l.b16 %v204
    %v258 = vunpack.c.h.b16 %v204
    %v259 = vpack.c.b16 %v229, %v227
    %v260 = vpack.c.b16 %v230, %v228
    %v261 = vpack.c.b16 %v233, %v231
    %v262 = vpack.c.b16 %v234, %v232
    %v263 = vpack.c.b16 %v237, %v235
    %v264 = vpack.c.b16 %v238, %v236
    %v265 = vpack.c.b16 %v241, %v239
    %v266 = vpack.c.b16 %v242, %v240
    %v267 = vpack.c.b16 %v245, %v243
    %v268 = vpack.c.b16 %v246, %v244
    %v269 = vpack.c.b16 %v249, %v247
    %v270 = vpack.c.b16 %v250, %v248
    %v271 = vpack.c.b16 %v253, %v251
    %v272 = vpack.c.b16 %v254, %v252
    %v273 = vpack.c.b16 %v257, %v255
    %v274 = vpack.c.b16 %v258, %v256
    %291 = vmatpush.bf16.msra.mxu0 %v273
    %292 = vmatpush.bf16.msra.mxu0 %v271
    %293 = vmatpush.bf16.msra.mxu0 %v269
    %294 = vmatpush.bf16.msra.mxu0 %v267
    %295 = vmatpush.bf16.msra.mxu0 %v265
    %296 = vmatpush.bf16.msra.mxu0 %v263
    %297 = vmatpush.bf16.msra.mxu0 %v261
    %298 = vmatpush.bf16.msra.mxu0 %v259
    %299 = vmatmul.bf16.gmra.mxu0 %v188
    %v300 = vpop.f32.mrf.mxu0
    %v301 = vadd.f32 %v207, %v300
    %v302 = vpop.f32.mrf.mxu0
    %v303 = vadd.f32 %v207, %v302
    %304 = vdwg.mxu0
    %305 = vmatpush.bf16.msra.mxu0 %v274
    %306 = vmatpush.bf16.msra.mxu0 %v272
    %307 = vmatpush.bf16.msra.mxu0 %v270
    %308 = vmatpush.bf16.msra.mxu0 %v268
    %309 = vmatpush.bf16.msra.mxu0 %v266
    %310 = vmatpush.bf16.msra.mxu0 %v264
    %311 = vmatpush.bf16.msra.mxu0 %v262
    %312 = vmatpush.bf16.msra.mxu0 %v260
    %313 = vmatmul.bf16.gmra.mxu0 %v188
    %v314 = vpop.f32.mrf.mxu0
    %v315 = vadd.f32 %v208, %v314
    %v316 = vpop.f32.mrf.mxu0
    %v317 = vadd.f32 %v208, %v316
    %318 = vdwg.mxu0
    %v319 = vld [vmem:[%s1] sm:$0xff]
    %v320 = vld [vmem:[%s1 + $0x8] sm:$0xff]
    %v321 = vmul.f32 %v315, 1.442695
    %v322 = vpow.pop %v321
    %v323 = vmul.f32 %v317, 1.442695
    %v324 = vpow.pop %v323
    %v325 = vmul.f32 %v319, %v322
    %v326 = vmul.f32 %v320, %v324
    %v327 = vadd.f32 %v325, %v301
    %v328 = vadd.f32 %v326, %v303
    %v329 = vpack.c.bf16 %v328, %v327
    %v330 = vld [vmem:[#allocation7] sm:$0xf]
    %v331 = vld [vmem:[#allocation7 + $0x4] sm:$0xf]
    %v332 = vld [vmem:[#allocation7 + $0x8] sm:$0xf]
    %v333 = vld [vmem:[#allocation7 + $0xc] sm:$0xf]
    %v334 = vld [vmem:[#allocation7 + $0x10] sm:$0xf]
    %v335 = vld [vmem:[#allocation7 + $0x14] sm:$0xf]
    %v336 = vld [vmem:[#allocation7 + $0x18] sm:$0xf]
    %v337 = vld [vmem:[#allocation7 + $0x1c] sm:$0xf]
    %v338 = vld [vmem:[#allocation7 + $0x20] sm:$0xf]
    %v339 = vld [vmem:[#allocation7 + $0x24] sm:$0xf]
    %v340 = vld [vmem:[#allocation7 + $0x28] sm:$0xf]
    %v341 = vld [vmem:[#allocation7 + $0x2c] sm:$0xf]
    %v342 = vld [vmem:[#allocation7 + $0x30] sm:$0xf]
    %v343 = vld [vmem:[#allocation7 + $0x34] sm:$0xf]
    %v344 = vld [vmem:[#allocation7 + $0x38] sm:$0xf]
    %v345 = vld [vmem:[#allocation7 + $0x3c] sm:$0xf]
    %v346 = vld [vmem:[%s7] sm:$0x1]
    %v348 = vperm.slane %v346, 0
    %v366 = vunpack.c.l.b16 %v330
    %v367 = vunpack.c.l.b16 %v331
    %v368 = vunpack.c.l.b16 %v332
    %v369 = vunpack.c.l.b16 %v333
    %v370 = vunpack.c.l.b16 %v334
    %v371 = vunpack.c.l.b16 %v335
    %v372 = vunpack.c.l.b16 %v336
    %v373 = vunpack.c.l.b16 %v337
    %v374 = vunpack.c.l.b16 %v338
    %v375 = vunpack.c.l.b16 %v339
    %v376 = vunpack.c.l.b16 %v340
    %v377 = vunpack.c.l.b16 %v341
    %v378 = vunpack.c.l.b16 %v342
    %v379 = vunpack.c.l.b16 %v343
    %v380 = vunpack.c.l.b16 %v344
    %v381 = vunpack.c.l.b16 %v345
    %v382 = vpack.c.b16 %v367, %v366
    %v383 = vpack.c.b16 %v369, %v368
    %v384 = vpack.c.b16 %v371, %v370
    %v385 = vpack.c.b16 %v373, %v372
    %v386 = vpack.c.b16 %v375, %v374
    %v387 = vpack.c.b16 %v377, %v376
    %v388 = vpack.c.b16 %v379, %v378
    %v389 = vpack.c.b16 %v381, %v380
    %398 = vmatpush.bf16.msra.mxu0 %v389
    %399 = vmatpush.bf16.msra.mxu0 %v388
    %400 = vmatpush.bf16.msra.mxu0 %v387
    %401 = vmatpush.bf16.msra.mxu0 %v386
    %402 = vmatpush.bf16.msra.mxu0 %v385
    %403 = vmatpush.bf16.msra.mxu0 %v384
    %404 = vmatpush.bf16.msra.mxu0 %v383
    %405 = vmatpush.bf16.msra.mxu0 %v382
    %406 = vmatmul.bf16.gmra.mxu0 %v329
    %v407 = vpop.f32.mrf.mxu0
    %v408 = vadd.f32 %v348, %v407
    %v409 = vpop.f32.mrf.mxu0
    %v410 = vadd.f32 %v348, %v409
    %411 = vdwg.mxu0
    %v412 = vmax.f32 %v408, 0.0
    %v413 = vmax.f32 %v410, 0.0
    %v414 = vpack.c.bf16 %v413, %v412
    %v415 = vld [vmem:[#allocation8] sm:$0xf]
    %v416 = vld [vmem:[#allocation8 + $0x4] sm:$0xf]
    %v417 = vld [vmem:[#allocation8 + $0x8] sm:$0xf]
    %v418 = vld [vmem:[#allocation8 + $0xc] sm:$0xf]
    %v419 = vld [vmem:[#allocation8 + $0x10] sm:$0xf]
    %v420 = vld [vmem:[#allocation8 + $0x14] sm:$0xf]
    %v421 = vld [vmem:[#allocation8 + $0x18] sm:$0xf]
    %v422 = vld [vmem:[#allocation8 + $0x1c] sm:$0xf]
    %v423 = vld [vmem:[#allocation8 + $0x20] sm:$0xf]
    %v424 = vld [vmem:[#allocation8 + $0x24] sm:$0xf]
    %v425 = vld [vmem:[#allocation8 + $0x28] sm:$0xf]
    %v426 = vld [vmem:[#allocation8 + $0x2c] sm:$0xf]
    %v427 = vld [vmem:[#allocation8 + $0x30] sm:$0xf]
    %v428 = vld [vmem:[#allocation8 + $0x34] sm:$0xf]
    %v429 = vld [vmem:[#allocation8 + $0x38] sm:$0xf]
    %v430 = vld [vmem:[#allocation8 + $0x3c] sm:$0xf]
    %v431 = vld [vmem:[%s9] sm:$0x1]
    %v433 = vperm.slane %v431, 0
    %v451 = vunpack.c.l.b16 %v415
    %v452 = vunpack.c.l.b16 %v416
    %v453 = vunpack.c.l.b16 %v417
    %v454 = vunpack.c.l.b16 %v418
    %v455 = vunpack.c.l.b16 %v419
    %v456 = vunpack.c.l.b16 %v420
    %v457 = vunpack.c.l.b16 %v421
    %v458 = vunpack.c.l.b16 %v422
    %v459 = vunpack.c.l.b16 %v423
    %v460 = vunpack.c.l.b16 %v424
    %v461 = vunpack.c.l.b16 %v425
    %v462 = vunpack.c.l.b16 %v426
    %v463 = vunpack.c.l.b16 %v427
    %v464 = vunpack.c.l.b16 %v428
    %v465 = vunpack.c.l.b16 %v429
    %v466 = vunpack.c.l.b16 %v430
    %v467 = vpack.c.b16 %v452, %v451
    %v468 = vpack.c.b16 %v454, %v453
    %v469 = vpack.c.b16 %v456, %v455
    %v470 = vpack.c.b16 %v458, %v457
    %v471 = vpack.c.b16 %v460, %v459
    %v472 = vpack.c.b16 %v462, %v461
    %v473 = vpack.c.b16 %v464, %v463
    %v474 = vpack.c.b16 %v466, %v465
    %483 = vmatpush.bf16.msra.mxu0 %v474
    %484 = vmatpush.bf16.msra.mxu0 %v473
    %485 = vmatpush.bf16.msra.mxu0 %v472
    %486 = vmatpush.bf16.msra.mxu0 %v471
    %487 = vmatpush.bf16.msra.mxu0 %v470
    %488 = vmatpush.bf16.msra.mxu0 %v469
    %489 = vmatpush.bf16.msra.mxu0 %v468
    %490 = vmatpush.bf16.msra.mxu0 %v467
    %491 = vmatmul.bf16.gmra.mxu0 %v414
    %v492 = vpop.f32.mrf.mxu0
    %v493 = vadd.f32 %v433, %v492
    %v494 = vpop.f32.mrf.mxu0
    %v495 = vadd.f32 %v433, %v494
    %496 = vdwg.mxu0
    %497 = vst [vmem:[%s10] sm:$0xff] %v301
    %498 = vst [vmem:[%s10 + $0x8] sm:$0xff] %v315
    %499 = vst [vmem:[%s10 + $0x10] sm:$0xff] %v303
    %500 = vst [vmem:[%s10 + $0x18] sm:$0xff] %v317
    %501 = vst [vmem:[#allocation10] sm:$0xff] %v493
    %502 = vst [vmem:[#allocation10 + $0x8] sm:$0xff] %v495
    // Predicated region
    $region58: #{vae_forward.1} parent=1 // pred_check
      _
    $region59: #{vae_forward.1} parent=1 // pred_check_branch
      %504 = sbr.rel (0) target = $region61
    $region60: #{vae_forward.1} parent=1 // pred_region
      _
    $region61: #{vae_forward.1} parent=1 // pred_fallthru
      _
    // Predicated region
    $region62: #{vae_forward.1} parent=1 // pred_check
      _
    $region63: #{vae_forward.1} parent=1 // pred_check_branch
      %506 = sbr.rel (0) target = $region65
    $region64: #{vae_forward.1} parent=1 // pred_region
      %508 = vsyncadd [#allocation4], 0
      %s509 = sshll.u32 [#allocation10], 4
      %s510 = int_to_ptr.vmem [resolvable:$true] %s509
      %s511 = sshll.u32 %s11, 4
      %s512 = int_to_ptr.hbm [resolvable:$true] %s511
      %517 = dma.vmem_to_hbm [thread:$0]  %s510, 256, %s512, [#allocation4], 128, 128, 8
    $region65: #{vae_forward.1} parent=1 // pred_fallthru
      _
    // Predicated region
    $region66: #{vae_forward.1} parent=1 // pred_check
      _
    $region67: #{vae_forward.1} parent=1 // pred_check_branch
      %519 = sbr.rel (0) target = $region69
    $region68: #{vae_forward.1} parent=1 // pred_region
      _
    $region69: #{vae_forward.1} parent=1 // pred_fallthru
      _
    // Predicated region
    $region70: #{vae_forward.1} parent=1 // pred_check
      _
    $region71: #{vae_forward.1} parent=1 // pred_check_branch
      %521 = sbr.rel (0) target = $region73
    $region72: #{vae_forward.1} parent=1 // pred_region
      %523 = dma.done [#allocation4], 256
    $region73: #{vae_forward.1} parent=1 // pred_fallthru
      _
    %524 = vsyncpa [#allocation3], 1
    %525 = vsyncpa [#allocation6], 1
    %526 = vsyncpa [#allocation9], 1
    %527 = vsyncpa [#allocation4], 1

</llo_original>
